<compile_context>
chip_gen: v5e
topology: v5e:2x2
jax: 0.10.0
libtpu: 0.0.40
codegen_flags: <defaults>
</compile_context>

<pallas_src>
import jax
import jax.numpy as jnp
from jax import lax
from jax.experimental import pallas as pl
from jax.experimental.pallas import tpu as pltpu


def residual_block_kernel(p_ref, w_ref, out_ref):
    """Single grid step.

    p_ref   : (N, K, HW)   patches^T, lane-dense (HW on lanes), last K-row is ones
    w_ref   : (Cout, K)    folded weights (3x3*BN1*1x1*BN2 + downsample + bias col)
    out_ref : (N, Cout, HW) NCHW-flattened output (lane-dense, unmasked stores)
    """
    w = w_ref[...]                                            # (Cout, K), loaded once
    n_batch = out_ref.shape[0]
    for n in range(n_batch):                                  # static unroll (N=2)
        acc = jnp.dot(w, p_ref[n],
                      preferred_element_type=jnp.float32)     # (Cout, HW) on the MXU
        out_ref[n] = jnp.maximum(acc, 0.0).astype(out_ref.dtype)


def residual_block_pallas(x_nchw, params, eps=1e-5):
    """x_nchw: (N, Cin, H, W) float32.  Returns (N, Cout, H, W) float32."""
    (w1_oihw, gamma1, beta1, mean1, var1,
     w2_oihw, gamma2, beta2, mean2, var2, wd_oihw) = params

    N, Cin, H, W = x_nchw.shape
    Cout = w2_oihw.shape[0]
    HW = H * W
    K = 9 * Cin + 1                                           # 9 taps * Cin + bias row

    # ---- fold BN1 + 1x1 conv + BN2 + downsample + bias into the 3x3 taps ----
    s1 = gamma1 / jnp.sqrt(var1 + eps)                        # (Cin,)
    b1 = beta1 - mean1 * s1                                   # (Cin,)
    s2 = gamma2 / jnp.sqrt(var2 + eps)                        # (Cout,)
    b2 = beta2 - mean2 * s2                                   # (Cout,)

    w2 = jnp.transpose(w2_oihw[:, :, 0, 0])                   # (Cin, Cout)
    wd = jnp.transpose(wd_oihw[:, :, 0, 0])                   # (Cin, Cout)
    w2p = (s1[:, None] * w2) * s2[None, :]                    # diag(s1) @ W2 @ diag(s2)

    w1 = jnp.transpose(w1_oihw, (2, 3, 1, 0)).reshape(9, Cin, Cin)   # (tap, I, O1)
    wf = jnp.einsum('tio,oc->tic', w1, w2p)                   # (9, Cin, Cout)
    wf = wf.at[4].add(wd)                                     # downsample -> center tap (stride=1)
    bias = (b1 @ w2) * s2 + b2                                # (Cout,)
    wftb = jnp.concatenate(
        [jnp.transpose(wf.reshape(9 * Cin, Cout)), bias[:, None]], axis=1)  # (Cout, K)

    # ---- wrapper-side im2col (single fused XLA pass over a tiny tensor) ----
    # patches[n, t*Cin + i, h*W + w] = xpad[n, i, h + dh(t), w + dw(t)]; last row = 1.
    x_pad = jnp.pad(x_nchw, ((0, 0), (0, 0), (1, 1), (1, 1)))
    taps = [x_pad[:, :, dh:dh + H, dw:dw + W].reshape(N, Cin, HW)
            for dh in range(3) for dw in range(3)]
    taps.append(jnp.ones((N, 1, HW), x_nchw.dtype))
    patches = jnp.concatenate(taps, axis=1)                   # (N, K, HW), lane-dense

    out = pl.pallas_call(
        residual_block_kernel,
        out_shape=jax.ShapeDtypeStruct((N, Cout, HW), jnp.float32),
        grid_spec=pltpu.PrefetchScalarGridSpec(
            num_scalar_prefetch=0,
            grid=(1,),                                        # single step: no per-step overhead
            in_specs=[
                pl.BlockSpec((N, K, HW), lambda i: (0, 0, 0)),
                pl.BlockSpec((Cout, K), lambda i: (0, 0)),
            ],
            out_specs=pl.BlockSpec((N, Cout, HW), lambda i: (0, 0, 0)),
        ),
        compiler_params=pltpu.CompilerParams(
            dimension_semantics=("arbitrary",)),
        cost_estimate=pl.CostEstimate(
            flops=2 * N * Cout * K * HW,
            transcendentals=0,
            bytes_accessed=(N * K * HW + Cout * K + N * Cout * HW) * 4),
    )(patches, wftb)

    # Output is already NCHW-ordered in memory: this reshape is free.
    return out.reshape(N, Cout, H, W)


def residual_block_reference(x_nchw, params, eps=1e-5):
    """Pure-JAX reference matching the PyTorch forward (BN in eval mode)."""
    (w1, g1, b1, m1, v1, w2, g2, b2, m2, v2, wd) = params

    def bn(y, g, b, m, v):
        return (y - m[None, :, None, None]) / jnp.sqrt(v + eps)[None, :, None, None] \
            * g[None, :, None, None] + b[None, :, None, None]

    dn = ('NCHW', 'OIHW', 'NCHW')
    y = lax.conv_general_dilated(x_nchw, w1, (1, 1), ((1, 1), (1, 1)),
                                 dimension_numbers=dn)
    y = bn(y, g1, b1, m1, v1)
    y = lax.conv_general_dilated(y, w2, (1, 1), ((0, 0), (0, 0)),
                                 dimension_numbers=dn)
    y = bn(y, g2, b2, m2, v2)
    sc = lax.conv_general_dilated(x_nchw, wd, (1, 1), ((0, 0), (0, 0)),
                                  dimension_numbers=dn)
    return jnp.maximum(y + sc, 0.0)


def make_params(key, in_channel, out_channel):
    ks = jax.random.split(key, 8)
    w1 = 0.1 * jax.random.normal(ks[0], (in_channel, in_channel, 3, 3), jnp.float32)
    w2 = 0.1 * jax.random.normal(ks[1], (out_channel, in_channel, 1, 1), jnp.float32)
    wd = 0.1 * jax.random.normal(ks[2], (out_channel, in_channel, 1, 1), jnp.float32)
    gamma1 = 1.0 + 0.1 * jax.random.normal(ks[3], (in_channel,), jnp.float32)
    beta1 = 0.1 * jax.random.normal(ks[4], (in_channel,), jnp.float32)
    mean1 = 0.05 * jax.random.normal(ks[5], (in_channel,), jnp.float32)
    var1 = 1.0 + 0.1 * jax.random.uniform(ks[6], (in_channel,), jnp.float32)
    gamma2 = 1.0 + 0.1 * jax.random.normal(ks[7], (out_channel,), jnp.float32)
    beta2 = jnp.zeros((out_channel,), jnp.float32)
    mean2 = jnp.zeros((out_channel,), jnp.float32)
    var2 = jnp.ones((out_channel,), jnp.float32)
    return (w1, gamma1, beta1, mean1, var1,
            w2, gamma2, beta2, mean2, var2, wd)


if __name__ == "__main__":
    # ResidualBlock(in_channel=4, out_channel=8)  -> the in != out branch
    N, Cin, H, W = 2, 4, 16, 16
    Cout = 8

    key = jax.random.PRNGKey(0)
    kx, kp = jax.random.split(key)
    x = jax.random.normal(kx, (N, Cin, H, W), jnp.float32)
    params = make_params(kp, Cin, Cout)

    out = residual_block_pallas(x, params)
    out = jax.block_until_ready(out)

    ref = residual_block_reference(x, params)
    assert out.shape == (N, Cout, H, W)
    assert jnp.allclose(out, ref, rtol=1e-3, atol=1e-3), \
        float(jnp.max(jnp.abs(out - ref)))

    print("KERNEL_OK")
</pallas_src>

<mosaic_0001>
module attributes {stable_mosaic.version = 11 : i64} {
  func.func @residual_block_kernel(%arg0: i32, %arg1: memref<2x37x256xf32, #tpu.memory_space<vmem>>, %arg2: memref<8x37xf32, #tpu.memory_space<vmem>>, %arg3: memref<2x8x256xf32, #tpu.memory_space<vmem>>) attributes {dimension_semantics = [#tpu.dimension_semantics<arbitrary>], iteration_bounds = array<i64: 1>, scalar_prefetch = 0 : i64, scratch_operands = 0 : i64, tpu.core_type = #tpu.core_type<tc>, window_params = [{pipeline_mode = #tpu.pipeline_mode<synchronous>, transform_indices = @transform_0, window_bounds = array<i64: 2, 37, 256>}, {pipeline_mode = #tpu.pipeline_mode<synchronous>, transform_indices = @transform_1, window_bounds = array<i64: 8, 37>}, {pipeline_mode = #tpu.pipeline_mode<synchronous>, transform_indices = @transform_2, window_bounds = array<i64: 2, 8, 256>}]} {
    %c0 = arith.constant 0 : index
    %c0_0 = arith.constant 0 : index
    %0 = vector.load %arg2[%c0, %c0_0] : memref<8x37xf32, #tpu.memory_space<vmem>>, vector<8x37xf32>
    %c0_1 = arith.constant 0 : index
    %c0_2 = arith.constant 0 : index
    %c0_3 = arith.constant 0 : index
    %1 = vector.load %arg1[%c0_1, %c0_2, %c0_3] : memref<2x37x256xf32, #tpu.memory_space<vmem>>, vector<1x37x256xf32>
    %2 = vector.shape_cast %1 : vector<1x37x256xf32> to vector<37x256xf32>
    %cst = arith.constant dense<0.000000e+00> : vector<8x256xf32>
    %3 = tpu.matmul %0, %2, %cst {dimension_numbers = #tpu.dot_dimension_numbers<[1], [0], [0], [1], [0, 0, 1, 1], [], []>} : vector<8x37xf32>, vector<37x256xf32>, vector<8x256xf32> -> vector<8x256xf32>
    %cst_4 = arith.constant 0.000000e+00 : f32
    %4 = vector.broadcast %cst_4 : f32 to vector<8x256xf32>
    %5 = arith.maximumf %3, %4 : vector<8x256xf32>
    %c0_5 = arith.constant 0 : index
    %c0_6 = arith.constant 0 : index
    %c0_7 = arith.constant 0 : index
    %6 = vector.load %arg3[%c0_5, %c0_6, %c0_7] : memref<2x8x256xf32, #tpu.memory_space<vmem>>, vector<1x8x256xf32>
    %7 = vector.shape_cast %6 : vector<1x8x256xf32> to vector<8x256xf32>
    %8 = vector.shape_cast %5 : vector<8x256xf32> to vector<1x8x256xf32>
    tpu.vector_store %arg3[%c0_5, %c0_6, %c0_7], %8 {strides = array<i32>} : memref<2x8x256xf32, #tpu.memory_space<vmem>>, vector<1x8x256xf32>,
    %c1 = arith.constant 1 : index
    %c0_8 = arith.constant 0 : index
    %c0_9 = arith.constant 0 : index
    %9 = vector.load %arg1[%c1, %c0_8, %c0_9] : memref<2x37x256xf32, #tpu.memory_space<vmem>>, vector<1x37x256xf32>
    %10 = vector.shape_cast %9 : vector<1x37x256xf32> to vector<37x256xf32>
    %cst_10 = arith.constant dense<0.000000e+00> : vector<8x256xf32>
    %11 = tpu.matmul %0, %10, %cst_10 {dimension_numbers = #tpu.dot_dimension_numbers<[1], [0], [0], [1], [0, 0, 1, 1], [], []>} : vector<8x37xf32>, vector<37x256xf32>, vector<8x256xf32> -> vector<8x256xf32>
    %cst_11 = arith.constant 0.000000e+00 : f32
    %12 = vector.broadcast %cst_11 : f32 to vector<8x256xf32>
    %13 = arith.maximumf %11, %12 : vector<8x256xf32>
    %c1_12 = arith.constant 1 : index
    %c0_13 = arith.constant 0 : index
    %c0_14 = arith.constant 0 : index
    %14 = vector.load %arg3[%c1_12, %c0_13, %c0_14] : memref<2x8x256xf32, #tpu.memory_space<vmem>>, vector<1x8x256xf32>
    %15 = vector.shape_cast %14 : vector<1x8x256xf32> to vector<8x256xf32>
    %16 = vector.shape_cast %13 : vector<8x256xf32> to vector<1x8x256xf32>
    tpu.vector_store %arg3[%c1_12, %c0_13, %c0_14], %16 {strides = array<i32>} : memref<2x8x256xf32, #tpu.memory_space<vmem>>, vector<1x8x256xf32>,
    return
  }
  func.func @transform_0(%arg0: i32) -> (i32, i32, i32) {
    %c0_i32 = arith.constant 0 : i32
    %c0_i32_0 = arith.constant 0 : i32
    %c0_i32_1 = arith.constant 0 : i32
    %c0_i32_2 = arith.constant 0 : i32
    return %c0_i32, %c0_i32_0, %c0_i32_1 : i32, i32, i32
  }
  func.func @transform_1(%arg0: i32) -> (i32, i32) {
    %c0_i32 = arith.constant 0 : i32
    %c0_i32_0 = arith.constant 0 : i32
    %c0_i32_1 = arith.constant 0 : i32
    return %c0_i32, %c0_i32_0 : i32, i32
  }
  func.func @transform_2(%arg0: i32) -> (i32, i32, i32) {
    %c0_i32 = arith.constant 0 : i32
    %c0_i32_0 = arith.constant 0 : i32
    %c0_i32_1 = arith.constant 0 : i32
    %c0_i32_2 = arith.constant 0 : i32
    return %c0_i32, %c0_i32_0, %c0_i32_1 : i32, i32, i32
  }
}

</mosaic_0001>

<llo_original>
// kernel: tpu_custom_call.1
$region0: #{tpu_custom_call.1}
  #allocation0 [shape = 'u32[]', space=smem, size = 0x4, offset = 0x4, fixed_abs, tag = 'smem constant byte address 0x4 - core index']
  #allocation1 [shape = 'u32[72,128]{1,0:T(1,128)}', space=vmem, size = 0x9000, scoped, tag = 'internal scratch']
  %s0 = inlined_call_operand.vmem [shape: f32[2,37,256], index: 0, kind: input, shape index: {}]
  %s1 = inlined_call_operand.vmem [shape: f32[8,37], index: 1, kind: input, shape index: {}]
  %s2 = inlined_call_operand.hbm [shape: f32[2,8,256], index: 2, kind: output, shape index: {}]
  %s3 = sld [smem:[#allocation0]]
  $region18: #{tpu_custom_call.1} parent=0
    _
  %s5 = ssub.s32 1, %s3
  %s6 = scalar_select 0, %s5, %s3
  $region1: #{tpu_custom_call.1} parent=0
    #allocation2 [shape = 'u8[16384]{0}', space=vmem, size = 0x4000, scoped, tag = 'output window, operand 0, single buffered']
    #allocation3 [shape = 's32[1]{0}', space=sflag, size = 0x4, scoped, tag = 'scoped memory for tpu_custom_call.1']
    %7 = vsyncpa [#allocation3], 0
    // Predicated region
    $region2: #{tpu_custom_call.1} parent=1 // pred_check
      _
    $region3: #{tpu_custom_call.1} parent=1 // pred_check_branch
      %9 = sbr.rel (0) target = $region5
    $region4: #{tpu_custom_call.1} parent=1 // pred_region
      _
    $region5: #{tpu_custom_call.1} parent=1 // pred_fallthru
      _
    // Predicated region
    $region6: #{tpu_custom_call.1} parent=1 // pred_check
      _
    $region7: #{tpu_custom_call.1} parent=1 // pred_check_branch
      %11 = sbr.rel (0) target = $region9
    $region8: #{tpu_custom_call.1} parent=1 // pred_region
      _
    $region9: #{tpu_custom_call.1} parent=1 // pred_fallthru
      _
    %v12 = vld [vmem:[%s1] sm:$0xff]
    %v13 = vld [vmem:[%s0] sm:$0xff]
    %v14 = vld [vmem:[%s0 + $0x8] sm:$0xff]
    %v15 = vld [vmem:[%s0 + $0x10] sm:$0xff]
    %v16 = vld [vmem:[%s0 + $0x18] sm:$0xff]
    %v17 = vld [vmem:[%s0 + $0x20] sm:$0xff]
    %v18 = vld [vmem:[%s0 + $0x28] sm:$0xff]
    %v19 = vld [vmem:[%s0 + $0x30] sm:$0xff]
    %v20 = vld [vmem:[%s0 + $0x38] sm:$0xff]
    %v21 = vld [vmem:[%s0 + $0x40] sm:$0x1f]
    %v22 = vld [vmem:[%s0 + $0x48] sm:$0x1f]
    %vm23 = vcmask 302080
    %v25 = vsel %vm23, %v12, 0
    %vm27 = vcmask 1044480
    %v29 = vsel %vm27, %v21, 0
    %v32 = vsel %vm27, %v22, 0
    %34 = vmatpush.msra.mxu0 0.0
    %35 = vmatpush.msra.mxu0 0.0
    %36 = vmatpush.msra.mxu0 0.0
    %37 = vmatpush.msra.mxu0 0.0
    %38 = vmatpush.msra.mxu0 0.0
    %39 = vmatpush.msra.mxu0 0.0
    %40 = vmatpush.msra.mxu0 0.0
    %41 = vmatpush.msra.mxu0 0.0
    %42 = vmatpush.msra.mxu0 0.0
    %43 = vmatpush.msra.mxu0 0.0
    %44 = vmatpush.msra.mxu0 0.0
    %45 = vmatpush.msra.mxu0 %v29
    %46 = vmatpush.msra.mxu0 %v19
    %47 = vmatpush.msra.mxu0 %v17
    %48 = vmatpush.msra.mxu0 %v15
    %49 = vmatpush.msra.mxu0 %v13
    %50 = vmatmul.f32.gmra.mxu0 %v25
    %v51 = vpop.f32.mrf.mxu0
    %v52 = vadd.f32 0.0, %v51
    %53 = vdwg.mxu0
    %54 = vmatpush.msra.mxu0 0.0
    %55 = vmatpush.msra.mxu0 0.0
    %56 = vmatpush.msra.mxu0 0.0
    %57 = vmatpush.msra.mxu0 0.0
    %58 = vmatpush.msra.mxu0 0.0
    %59 = vmatpush.msra.mxu0 0.0
    %60 = vmatpush.msra.mxu0 0.0
    %61 = vmatpush.msra.mxu0 0.0
    %62 = vmatpush.msra.mxu0 0.0
    %63 = vmatpush.msra.mxu0 0.0
    %64 = vmatpush.msra.mxu0 0.0
    %65 = vmatpush.msra.mxu0 %v32
    %66 = vmatpush.msra.mxu0 %v20
    %67 = vmatpush.msra.mxu0 %v18
    %68 = vmatpush.msra.mxu0 %v16
    %69 = vmatpush.msra.mxu0 %v14
    %70 = vmatmul.f32.gmra.mxu0 %v25
    %v71 = vpop.f32.mrf.mxu0
    %v72 = vadd.f32 0.0, %v71
    %73 = vdwg.mxu0
    %v74 = vmax.f32 %v52, 0.0
    %v75 = vmax.f32 %v72, 0.0
    %76 = vst [vmem:[#allocation2] sm:$0xff] %v74
    %77 = vst [vmem:[#allocation2 + $0x8] sm:$0xff] %v75
    %s78 = scalar_lea.vmem %s0, 80
    %v79 = vld [vmem:[%s78] sm:$0xff]
    %v80 = vld [vmem:[%s78 + $0x8] sm:$0xff]
    %v81 = vld [vmem:[%s78 + $0x10] sm:$0xff]
    %v82 = vld [vmem:[%s78 + $0x18] sm:$0xff]
    %v83 = vld [vmem:[%s78 + $0x20] sm:$0xff]
    %v84 = vld [vmem:[%s78 + $0x28] sm:$0xff]
    %v85 = vld [vmem:[%s78 + $0x30] sm:$0xff]
    %v86 = vld [vmem:[%s78 + $0x38] sm:$0xff]
    %v87 = vld [vmem:[%s78 + $0x40] sm:$0x1f]
    %v88 = vld [vmem:[%s78 + $0x48] sm:$0x1f]
    %v90 = vsel %vm27, %v87, 0
    %v93 = vsel %vm27, %v88, 0
    %95 = vmatpush.msra.mxu0 0.0
    %96 = vmatpush.msra.mxu0 0.0
    %97 = vmatpush.msra.mxu0 0.0
    %98 = vmatpush.msra.mxu0 0.0
    %99 = vmatpush.msra.mxu0 0.0
    %100 = vmatpush.msra.mxu0 0.0
    %101 = vmatpush.msra.mxu0 0.0
    %102 = vmatpush.msra.mxu0 0.0
    %103 = vmatpush.msra.mxu0 0.0
    %104 = vmatpush.msra.mxu0 0.0
    %105 = vmatpush.msra.mxu0 0.0
    %106 = vmatpush.msra.mxu0 %v90
    %107 = vmatpush.msra.mxu0 %v85
    %108 = vmatpush.msra.mxu0 %v83
    %109 = vmatpush.msra.mxu0 %v81
    %110 = vmatpush.msra.mxu0 %v79
    %111 = vmatmul.f32.gmra.mxu0 %v25
    %v112 = vpop.f32.mrf.mxu0
    %v113 = vadd.f32 0.0, %v112
    %114 = vdwg.mxu0
    %115 = vmatpush.msra.mxu0 0.0
    %116 = vmatpush.msra.mxu0 0.0
    %117 = vmatpush.msra.mxu0 0.0
    %118 = vmatpush.msra.mxu0 0.0
    %119 = vmatpush.msra.mxu0 0.0
    %120 = vmatpush.msra.mxu0 0.0
    %121 = vmatpush.msra.mxu0 0.0
    %122 = vmatpush.msra.mxu0 0.0
    %123 = vmatpush.msra.mxu0 0.0
    %124 = vmatpush.msra.mxu0 0.0
    %125 = vmatpush.msra.mxu0 0.0
    %126 = vmatpush.msra.mxu0 %v93
    %127 = vmatpush.msra.mxu0 %v86
    %128 = vmatpush.msra.mxu0 %v84
    %129 = vmatpush.msra.mxu0 %v82
    %130 = vmatpush.msra.mxu0 %v80
    %131 = vmatmul.f32.gmra.mxu0 %v25
    %v132 = vpop.f32.mrf.mxu0
    %v133 = vadd.f32 0.0, %v132
    %134 = vdwg.mxu0
    %v135 = vmax.f32 %v113, 0.0
    %v136 = vmax.f32 %v133, 0.0
    %s137 = scalar_lea.vmem [#allocation2], 16
    %138 = vst [vmem:[%s137] sm:$0xff] %v135
    %139 = vst [vmem:[%s137 + $0x8] sm:$0xff] %v136
    // Predicated region
    $region10: #{tpu_custom_call.1} parent=1 // pred_check
      _
    $region11: #{tpu_custom_call.1} parent=1 // pred_check_branch
      %141 = sbr.rel (0) target = $region13
    $region12: #{tpu_custom_call.1} parent=1 // pred_region
      %143 = vsyncadd [#allocation3], 0
      %s144 = sshll.u32 [#allocation2], 4
      %s145 = int_to_ptr.vmem [resolvable:$true] %s144
      %s146 = sshll.u32 %s2, 4
      %s147 = int_to_ptr.hbm [resolvable:$true] %s146
      %152 = dma.vmem_to_hbm [thread:$0]  %s145, 512, %s147, [#allocation3], 256, 256, 16
    $region13: #{tpu_custom_call.1} parent=1 // pred_fallthru
      _
    // Predicated region
    $region14: #{tpu_custom_call.1} parent=1 // pred_check
      _
    $region15: #{tpu_custom_call.1} parent=1 // pred_check_branch
      %154 = sbr.rel (0) target = $region17
    $region16: #{tpu_custom_call.1} parent=1 // pred_region
      %156 = dma.done [#allocation3], 512
    $region17: #{tpu_custom_call.1} parent=1 // pred_fallthru
      _
    %157 = vsyncpa [#allocation3], 1

</llo_original>
